<compile_context>
chip_gen: v5e
topology: v5e:2x2
jax: 0.10.0
libtpu: 0.0.40
codegen_flags: <defaults>
</compile_context>

<pallas_src>
import functools

import jax
import jax.numpy as jnp
from jax import lax
from jax.experimental import pallas as pl
from jax.experimental.pallas import tpu as pltpu

LEAKY_SLOPE = 0.01   # nn.LeakyReLU() default
IN_EPS = 1e-5        # nn.InstanceNorm2d default

# Flip to jnp.bfloat16 for deeper blocks on v6e/v7x if the MXU ever becomes the
# binding unit.  Slabs/weights are stored in this dtype on the host; accumulation
# (preferred_element_type) and all VPU/EUP math stay f32.
MXU_OPERAND_DTYPE = jnp.float32


def _down_block_kernel(x_ref, w_ref, b_ref, o_ref, *, c_in, nb, hw):
    """One grid step = one batch group of `nb` samples.

    x_ref: (9*C_in, L)   per-tap activation slabs; lanes ordered [sample][h][w],
                         L = nb*HW.  Row block t*C_in:(t+1)*C_in is conv tap
                         t = kh*3 + kw.
    w_ref: (C_out, 9*C_in)  conv weight, column block t*C_in:(t+1)*C_in per tap.
    b_ref: (C_out, 1)       conv bias (lane broadcast).
    o_ref: (C_out, L)       output slab (single lane-dense store).
    """
    # ---- conv = 9 accumulating MXU matmuls, one per 3x3 tap (no scratch) -----
    acc = None
    for t in range(9):                       # small fixed trip count -> unroll
        xt = x_ref[t * c_in:(t + 1) * c_in, :]          # (C_in, L), lane-dense
        wt = w_ref[:, t * c_in:(t + 1) * c_in]          # (C_out, C_in)
        p = jnp.dot(wt, xt, preferred_element_type=jnp.float32)
        acc = p if acc is None else acc + p             # f32 register accumulate

    y = acc + b_ref[...].astype(jnp.float32)            # bias (lane broadcast)
    y = jnp.where(y > 0, y, LEAKY_SLOPE * y)            # LeakyReLU (f32 VPU)

    # ---- InstanceNorm2d: per-(sample, channel) stats over the FULL HW --------
    # Each sample owns a contiguous HW lane block; stats are lane reduces on
    # register values, assembled and stored as ONE (C_out, L) slab.
    parts = []
    for i in range(nb):
        yn = y[:, i * hw:(i + 1) * hw]                  # (C_out, HW)
        mean = jnp.mean(yn, axis=-1, keepdims=True)
        cen = yn - mean
        var = jnp.mean(cen * cen, axis=-1, keepdims=True)   # biased, as PyTorch
        parts.append(cen * lax.rsqrt(var + IN_EPS))
    out = parts[0] if nb == 1 else jnp.concatenate(parts, axis=-1)
    o_ref[...] = out.astype(o_ref.dtype)


def msunet_down_block(x_nchw, weight_oihw, bias, padding=1):
    """Forward pass of MSUNetDownBlock (norm='IN') with a Pallas TPU kernel.

    x_nchw:       (N, C_in, H, W)   float32
    weight_oihw:  (C_out, C_in, 3, 3)
    bias:         (C_out,)
    returns:      (N, C_out, H_out, W_out)
    """
    N, C_in, H, W = x_nchw.shape
    C_out = weight_oihw.shape[0]
    KH = KW = 3
    stride = 2
    H_out = (H + 2 * padding - KH) // stride + 1
    W_out = (W + 2 * padding - KW) // stride + 1
    HW = H_out * W_out

    # Adaptive batch grouping:
    #  * shallow levels (HW < 128): whole batch in one grid step so the matmul
    #    lane extent / output store is nb*HW-wide (128 here -> fully lane-dense).
    #  * production HW (>= 128): one sample per grid step, "parallel" over batch
    #    (v7x megacore + double-buffered DMA), per-step VMEM well under 64 MiB.
    nb = 1 if HW >= 128 else N
    G = N // nb
    L = nb * HW

    # ---- host glue: pad once, build the 9 per-tap slabs with strided slices --
    # (replaces the in-kernel masked-copy gather; these are plain XLA copies)
    x_pad = jnp.pad(x_nchw.astype(jnp.float32),
                    ((0, 0), (0, 0), (padding, padding), (padding, padding)))
    taps = []
    for kh in range(KH):
        for kw in range(KW):
            taps.append(lax.slice(
                x_pad,
                (0, 0, kh, kw),
                (N, C_in, kh + stride * (H_out - 1) + 1,
                 kw + stride * (W_out - 1) + 1),
                (1, 1, stride, stride)))                 # (N, C_in, H_out, W_out)
    x_taps = jnp.stack(taps, axis=1)                     # (N, 9, C_in, H_out, W_out)
    x_taps = x_taps.reshape(G, nb, KH * KW * C_in, HW)
    x_taps = jnp.transpose(x_taps, (0, 2, 1, 3)).reshape(G, KH * KW * C_in, L)
    x_taps = x_taps.astype(MXU_OPERAND_DTYPE)            # host-side cast (no in-kernel scratch cast)

    # weight (C_out, C_in, 3, 3) -> (C_out, kh, kw, C_in) -> (C_out, 9*C_in)
    w_mat = jnp.transpose(weight_oihw, (0, 2, 3, 1)).reshape(C_out, KH * KW * C_in)
    w_mat = w_mat.astype(MXU_OPERAND_DTYPE)
    b_mat = bias.reshape(C_out, 1).astype(jnp.float32)

    kernel = functools.partial(_down_block_kernel, c_in=C_in, nb=nb, hw=HW)

    out = pl.pallas_call(
        kernel,
        out_shape=jax.ShapeDtypeStruct((G, C_out, L), jnp.float32),
        grid_spec=pltpu.PrefetchScalarGridSpec(
            num_scalar_prefetch=0,
            grid=(G,),  # batch groups are independent (per-sample InstanceNorm)
            in_specs=[
                pl.BlockSpec((None, KH * KW * C_in, L), lambda g: (g, 0, 0)),
                pl.BlockSpec((C_out, KH * KW * C_in), lambda g: (0, 0)),
                pl.BlockSpec((C_out, 1), lambda g: (0, 0)),
            ],
            out_specs=pl.BlockSpec((None, C_out, L), lambda g: (g, 0, 0)),
        ),
        compiler_params=pltpu.CompilerParams(
            dimension_semantics=("parallel",)),
    )(x_taps, w_mat, b_mat)

    # (G, C_out, nb*HW) -> (N, C_out, H_out, W_out).  When nb == 1 (production)
    # the transpose is over a size-1 axis, i.e. a free bitcast.
    out = out.reshape(G, C_out, nb, H_out, W_out)
    out = jnp.transpose(out, (0, 2, 1, 3, 4)).reshape(N, C_out, H_out, W_out)
    return out


def _reference(x_nchw, weight_oihw, bias, padding=1):
    """Pure-JAX reference matching PyTorch semantics (for verification)."""
    y = lax.conv_general_dilated(
        x_nchw, weight_oihw,
        window_strides=(2, 2),
        padding=[(padding, padding), (padding, padding)],
        dimension_numbers=("NCHW", "OIHW", "NCHW"))
    y = y + bias.reshape(1, -1, 1, 1)
    y = jnp.where(y > 0, y, LEAKY_SLOPE * y)
    mean = jnp.mean(y, axis=(2, 3), keepdims=True)
    var = jnp.mean((y - mean) ** 2, axis=(2, 3), keepdims=True)
    return (y - mean) * lax.rsqrt(var + IN_EPS)


if __name__ == "__main__":
    key = jax.random.PRNGKey(0)
    k_x, k_w, k_b = jax.random.split(key, 3)

    N, C_in, H, W = 2, 4, 16, 16
    C_out = 8
    padding = 1

    x = jax.random.normal(k_x, (N, C_in, H, W), dtype=jnp.float32)
    # Deterministic synthetic parameters (shapes match nn.Conv2d(4, 8, 3, 2, 1)).
    fan_in = C_in * 3 * 3
    bound = 1.0 / (fan_in ** 0.5)
    weight = jax.random.uniform(k_w, (C_out, C_in, 3, 3),
                                minval=-bound, maxval=bound, dtype=jnp.float32)
    bias = jax.random.uniform(k_b, (C_out,),
                              minval=-bound, maxval=bound, dtype=jnp.float32)

    out = msunet_down_block(x, weight, bias, padding=padding)
    out = jax.block_until_ready(out)

    ref = jax.block_until_ready(_reference(x, weight, bias, padding=padding))
    assert out.shape == (N, C_out, H // 2, W // 2), out.shape
    assert jnp.allclose(out, ref, atol=1e-4, rtol=1e-4), float(
        jnp.max(jnp.abs(out - ref)))

    print("KERNEL_OK")
</pallas_src>

<mosaic_0001>
module attributes {stable_mosaic.version = 11 : i64} {
  func.func @_down_block_kernel(%arg0: i32, %arg1: memref<1x36x128xf32, #tpu.memory_space<vmem>>, %arg2: memref<8x36xf32, #tpu.memory_space<vmem>>, %arg3: memref<8x1xf32, #tpu.memory_space<vmem>>, %arg4: memref<1x8x128xf32, #tpu.memory_space<vmem>>) attributes {dimension_semantics = [#tpu.dimension_semantics<parallel>], iteration_bounds = array<i64: 1>, scalar_prefetch = 0 : i64, scratch_operands = 0 : i64, tpu.core_type = #tpu.core_type<tc>, window_params = [{transform_indices = @transform_0, window_bounds = array<i64: 1, 36, 128>}, {pipeline_mode = #tpu.pipeline_mode<synchronous>, transform_indices = @transform_1, window_bounds = array<i64: 8, 36>}, {pipeline_mode = #tpu.pipeline_mode<synchronous>, transform_indices = @transform_2, window_bounds = array<i64: 8, 1>}, {transform_indices = @transform_3, window_bounds = array<i64: 1, 8, 128>}]} {
    %c0 = arith.constant 0 : index
    %c0_0 = arith.constant 0 : index
    %c0_1 = arith.constant 0 : index
    %0 = vector.load %arg1[%c0, %c0_0, %c0_1] : memref<1x36x128xf32, #tpu.memory_space<vmem>>, vector<1x4x128xf32>
    %1 = vector.shape_cast %0 : vector<1x4x128xf32> to vector<4x128xf32>
    %c0_2 = arith.constant 0 : index
    %c0_3 = arith.constant 0 : index
    %2 = vector.load %arg2[%c0_2, %c0_3] : memref<8x36xf32, #tpu.memory_space<vmem>>, vector<8x4xf32>
    %cst = arith.constant dense<0.000000e+00> : vector<8x128xf32>
    %3 = tpu.matmul %2, %1, %cst {dimension_numbers = #tpu.dot_dimension_numbers<[1], [0], [0], [1], [0, 0, 1, 1], [], []>} : vector<8x4xf32>, vector<4x128xf32>, vector<8x128xf32> -> vector<8x128xf32>
    %c0_4 = arith.constant 0 : index
    %c4 = arith.constant 4 : index
    %c0_5 = arith.constant 0 : index
    %4 = vector.load %arg1[%c0_4, %c4, %c0_5] : memref<1x36x128xf32, #tpu.memory_space<vmem>>, vector<1x4x128xf32>
    %5 = vector.shape_cast %4 : vector<1x4x128xf32> to vector<4x128xf32>
    %c0_6 = arith.constant 0 : index
    %c4_7 = arith.constant 4 : index
    %6 = vector.load %arg2[%c0_6, %c4_7] : memref<8x36xf32, #tpu.memory_space<vmem>>, vector<8x4xf32>
    %cst_8 = arith.constant dense<0.000000e+00> : vector<8x128xf32>
    %7 = tpu.matmul %6, %5, %cst_8 {dimension_numbers = #tpu.dot_dimension_numbers<[1], [0], [0], [1], [0, 0, 1, 1], [], []>} : vector<8x4xf32>, vector<4x128xf32>, vector<8x128xf32> -> vector<8x128xf32>
    %8 = arith.addf %3, %7 : vector<8x128xf32>
    %c0_9 = arith.constant 0 : index
    %c8 = arith.constant 8 : index
    %c0_10 = arith.constant 0 : index
    %9 = vector.load %arg1[%c0_9, %c8, %c0_10] : memref<1x36x128xf32, #tpu.memory_space<vmem>>, vector<1x4x128xf32>
    %10 = vector.shape_cast %9 : vector<1x4x128xf32> to vector<4x128xf32>
    %c0_11 = arith.constant 0 : index
    %c8_12 = arith.constant 8 : index
    %11 = vector.load %arg2[%c0_11, %c8_12] : memref<8x36xf32, #tpu.memory_space<vmem>>, vector<8x4xf32>
    %cst_13 = arith.constant dense<0.000000e+00> : vector<8x128xf32>
    %12 = tpu.matmul %11, %10, %cst_13 {dimension_numbers = #tpu.dot_dimension_numbers<[1], [0], [0], [1], [0, 0, 1, 1], [], []>} : vector<8x4xf32>, vector<4x128xf32>, vector<8x128xf32> -> vector<8x128xf32>
    %13 = arith.addf %8, %12 : vector<8x128xf32>
    %c0_14 = arith.constant 0 : index
    %c12 = arith.constant 12 : index
    %c0_15 = arith.constant 0 : index
    %14 = vector.load %arg1[%c0_14, %c12, %c0_15] : memref<1x36x128xf32, #tpu.memory_space<vmem>>, vector<1x4x128xf32>
    %15 = vector.shape_cast %14 : vector<1x4x128xf32> to vector<4x128xf32>
    %c0_16 = arith.constant 0 : index
    %c12_17 = arith.constant 12 : index
    %16 = vector.load %arg2[%c0_16, %c12_17] : memref<8x36xf32, #tpu.memory_space<vmem>>, vector<8x4xf32>
    %cst_18 = arith.constant dense<0.000000e+00> : vector<8x128xf32>
    %17 = tpu.matmul %16, %15, %cst_18 {dimension_numbers = #tpu.dot_dimension_numbers<[1], [0], [0], [1], [0, 0, 1, 1], [], []>} : vector<8x4xf32>, vector<4x128xf32>, vector<8x128xf32> -> vector<8x128xf32>
    %18 = arith.addf %13, %17 : vector<8x128xf32>
    %c0_19 = arith.constant 0 : index
    %c16 = arith.constant 16 : index
    %c0_20 = arith.constant 0 : index
    %19 = vector.load %arg1[%c0_19, %c16, %c0_20] : memref<1x36x128xf32, #tpu.memory_space<vmem>>, vector<1x4x128xf32>
    %20 = vector.shape_cast %19 : vector<1x4x128xf32> to vector<4x128xf32>
    %c0_21 = arith.constant 0 : index
    %c16_22 = arith.constant 16 : index
    %21 = vector.load %arg2[%c0_21, %c16_22] : memref<8x36xf32, #tpu.memory_space<vmem>>, vector<8x4xf32>
    %cst_23 = arith.constant dense<0.000000e+00> : vector<8x128xf32>
    %22 = tpu.matmul %21, %20, %cst_23 {dimension_numbers = #tpu.dot_dimension_numbers<[1], [0], [0], [1], [0, 0, 1, 1], [], []>} : vector<8x4xf32>, vector<4x128xf32>, vector<8x128xf32> -> vector<8x128xf32>
    %23 = arith.addf %18, %22 : vector<8x128xf32>
    %c0_24 = arith.constant 0 : index
    %c20 = arith.constant 20 : index
    %c0_25 = arith.constant 0 : index
    %24 = vector.load %arg1[%c0_24, %c20, %c0_25] : memref<1x36x128xf32, #tpu.memory_space<vmem>>, vector<1x4x128xf32>
    %25 = vector.shape_cast %24 : vector<1x4x128xf32> to vector<4x128xf32>
    %c0_26 = arith.constant 0 : index
    %c20_27 = arith.constant 20 : index
    %26 = vector.load %arg2[%c0_26, %c20_27] : memref<8x36xf32, #tpu.memory_space<vmem>>, vector<8x4xf32>
    %cst_28 = arith.constant dense<0.000000e+00> : vector<8x128xf32>
    %27 = tpu.matmul %26, %25, %cst_28 {dimension_numbers = #tpu.dot_dimension_numbers<[1], [0], [0], [1], [0, 0, 1, 1], [], []>} : vector<8x4xf32>, vector<4x128xf32>, vector<8x128xf32> -> vector<8x128xf32>
    %28 = arith.addf %23, %27 : vector<8x128xf32>
    %c0_29 = arith.constant 0 : index
    %c24 = arith.constant 24 : index
    %c0_30 = arith.constant 0 : index
    %29 = vector.load %arg1[%c0_29, %c24, %c0_30] : memref<1x36x128xf32, #tpu.memory_space<vmem>>, vector<1x4x128xf32>
    %30 = vector.shape_cast %29 : vector<1x4x128xf32> to vector<4x128xf32>
    %c0_31 = arith.constant 0 : index
    %c24_32 = arith.constant 24 : index
    %31 = vector.load %arg2[%c0_31, %c24_32] : memref<8x36xf32, #tpu.memory_space<vmem>>, vector<8x4xf32>
    %cst_33 = arith.constant dense<0.000000e+00> : vector<8x128xf32>
    %32 = tpu.matmul %31, %30, %cst_33 {dimension_numbers = #tpu.dot_dimension_numbers<[1], [0], [0], [1], [0, 0, 1, 1], [], []>} : vector<8x4xf32>, vector<4x128xf32>, vector<8x128xf32> -> vector<8x128xf32>
    %33 = arith.addf %28, %32 : vector<8x128xf32>
    %c0_34 = arith.constant 0 : index
    %c28 = arith.constant 28 : index
    %c0_35 = arith.constant 0 : index
    %34 = vector.load %arg1[%c0_34, %c28, %c0_35] : memref<1x36x128xf32, #tpu.memory_space<vmem>>, vector<1x4x128xf32>
    %35 = vector.shape_cast %34 : vector<1x4x128xf32> to vector<4x128xf32>
    %c0_36 = arith.constant 0 : index
    %c28_37 = arith.constant 28 : index
    %36 = vector.load %arg2[%c0_36, %c28_37] : memref<8x36xf32, #tpu.memory_space<vmem>>, vector<8x4xf32>
    %cst_38 = arith.constant dense<0.000000e+00> : vector<8x128xf32>
    %37 = tpu.matmul %36, %35, %cst_38 {dimension_numbers = #tpu.dot_dimension_numbers<[1], [0], [0], [1], [0, 0, 1, 1], [], []>} : vector<8x4xf32>, vector<4x128xf32>, vector<8x128xf32> -> vector<8x128xf32>
    %38 = arith.addf %33, %37 : vector<8x128xf32>
    %c0_39 = arith.constant 0 : index
    %c32 = arith.constant 32 : index
    %c0_40 = arith.constant 0 : index
    %39 = vector.load %arg1[%c0_39, %c32, %c0_40] : memref<1x36x128xf32, #tpu.memory_space<vmem>>, vector<1x4x128xf32>
    %40 = vector.shape_cast %39 : vector<1x4x128xf32> to vector<4x128xf32>
    %c0_41 = arith.constant 0 : index
    %c32_42 = arith.constant 32 : index
    %41 = vector.load %arg2[%c0_41, %c32_42] : memref<8x36xf32, #tpu.memory_space<vmem>>, vector<8x4xf32>
    %cst_43 = arith.constant dense<0.000000e+00> : vector<8x128xf32>
    %42 = tpu.matmul %41, %40, %cst_43 {dimension_numbers = #tpu.dot_dimension_numbers<[1], [0], [0], [1], [0, 0, 1, 1], [], []>} : vector<8x4xf32>, vector<4x128xf32>, vector<8x128xf32> -> vector<8x128xf32>
    %43 = arith.addf %38, %42 : vector<8x128xf32>
    %c0_44 = arith.constant 0 : index
    %c0_45 = arith.constant 0 : index
    %44 = vector.load %arg3[%c0_44, %c0_45] : memref<8x1xf32, #tpu.memory_space<vmem>>, vector<8x1xf32>
    %45 = vector.broadcast %44 : vector<8x1xf32> to vector<8x128xf32>
    %46 = arith.addf %43, %45 : vector<8x128xf32>
    %cst_46 = arith.constant 0.000000e+00 : f32
    %47 = vector.broadcast %cst_46 : f32 to vector<8x128xf32>
    %48 = arith.cmpf ogt, %46, %47 : vector<8x128xf32>
    %cst_47 = arith.constant 0.00999999977 : f32
    %49 = vector.broadcast %cst_47 : f32 to vector<8x128xf32>
    %50 = arith.mulf %49, %46 : vector<8x128xf32>
    %51 = arith.select %48, %46, %50 : vector<8x128xi1>, vector<8x128xf32>
    %52 = vector.extract_strided_slice %51 {offsets = [0, 0], sizes = [8, 64], strides = [1, 1]} : vector<8x128xf32> to vector<8x64xf32>
    %cst_48 = arith.constant dense<0.000000e+00> : vector<8xf32>
    %53 = vector.multi_reduction <add>, %52, %cst_48 [1] : vector<8x64xf32> to vector<8xf32>
    %54 = vector.shape_cast %53 : vector<8xf32> to vector<8x1xf32>
    %cst_49 = arith.constant 6.400000e+01 : f32
    %55 = vector.broadcast %cst_49 : f32 to vector<8x1xf32>
    %56 = arith.divf %54, %55 : vector<8x1xf32>
    %57 = vector.broadcast %56 : vector<8x1xf32> to vector<8x64xf32>
    %58 = arith.subf %52, %57 : vector<8x64xf32>
    %59 = arith.mulf %58, %58 : vector<8x64xf32>
    %cst_50 = arith.constant dense<0.000000e+00> : vector<8xf32>
    %60 = vector.multi_reduction <add>, %59, %cst_50 [1] : vector<8x64xf32> to vector<8xf32>
    %61 = vector.shape_cast %60 : vector<8xf32> to vector<8x1xf32>
    %cst_51 = arith.constant 6.400000e+01 : f32
    %62 = vector.broadcast %cst_51 : f32 to vector<8x1xf32>
    %63 = arith.divf %61, %62 : vector<8x1xf32>
    %cst_52 = arith.constant 9.99999974E-6 : f32
    %64 = vector.broadcast %cst_52 : f32 to vector<8x1xf32>
    %65 = arith.addf %63, %64 : vector<8x1xf32>
    %66 = math.rsqrt %65 : vector<8x1xf32>
    %67 = vector.broadcast %66 : vector<8x1xf32> to vector<8x64xf32>
    %68 = arith.mulf %58, %67 : vector<8x64xf32>
    %69 = vector.extract_strided_slice %51 {offsets = [0, 64], sizes = [8, 64], strides = [1, 1]} : vector<8x128xf32> to vector<8x64xf32>
    %cst_53 = arith.constant dense<0.000000e+00> : vector<8xf32>
    %70 = vector.multi_reduction <add>, %69, %cst_53 [1] : vector<8x64xf32> to vector<8xf32>
    %71 = vector.shape_cast %70 : vector<8xf32> to vector<8x1xf32>
    %cst_54 = arith.constant 6.400000e+01 : f32
    %72 = vector.broadcast %cst_54 : f32 to vector<8x1xf32>
    %73 = arith.divf %71, %72 : vector<8x1xf32>
    %74 = vector.broadcast %73 : vector<8x1xf32> to vector<8x64xf32>
    %75 = arith.subf %69, %74 : vector<8x64xf32>
    %76 = arith.mulf %75, %75 : vector<8x64xf32>
    %cst_55 = arith.constant dense<0.000000e+00> : vector<8xf32>
    %77 = vector.multi_reduction <add>, %76, %cst_55 [1] : vector<8x64xf32> to vector<8xf32>
    %78 = vector.shape_cast %77 : vector<8xf32> to vector<8x1xf32>
    %cst_56 = arith.constant 6.400000e+01 : f32
    %79 = vector.broadcast %cst_56 : f32 to vector<8x1xf32>
    %80 = arith.divf %78, %79 : vector<8x1xf32>
    %cst_57 = arith.constant 9.99999974E-6 : f32
    %81 = vector.broadcast %cst_57 : f32 to vector<8x1xf32>
    %82 = arith.addf %80, %81 : vector<8x1xf32>
    %83 = math.rsqrt %82 : vector<8x1xf32>
    %84 = vector.broadcast %83 : vector<8x1xf32> to vector<8x64xf32>
    %85 = arith.mulf %75, %84 : vector<8x64xf32>
    %86 = tpu.concatenate %68, %85 in 1 : vector<8x64xf32>, vector<8x64xf32> -> vector<8x128xf32>
    %c0_58 = arith.constant 0 : index
    %c0_59 = arith.constant 0 : index
    %c0_60 = arith.constant 0 : index
    %87 = vector.load %arg4[%c0_58, %c0_59, %c0_60] : memref<1x8x128xf32, #tpu.memory_space<vmem>>, vector<1x8x128xf32>
    %88 = vector.shape_cast %87 : vector<1x8x128xf32> to vector<8x128xf32>
    %89 = vector.shape_cast %86 : vector<8x128xf32> to vector<1x8x128xf32>
    tpu.vector_store %arg4[%c0_58, %c0_59, %c0_60], %89 {strides = array<i32>} : memref<1x8x128xf32, #tpu.memory_space<vmem>>, vector<1x8x128xf32>,
    return
  }
  func.func @transform_0(%arg0: i32) -> (i32, i32, i32) {
    %c0_i32 = arith.constant 0 : i32
    %c0_i32_0 = arith.constant 0 : i32
    %c0_i32_1 = arith.constant 0 : i32
    return %arg0, %c0_i32, %c0_i32_0 : i32, i32, i32
  }
  func.func @transform_1(%arg0: i32) -> (i32, i32) {
    %c0_i32 = arith.constant 0 : i32
    %c0_i32_0 = arith.constant 0 : i32
    %c0_i32_1 = arith.constant 0 : i32
    return %c0_i32, %c0_i32_0 : i32, i32
  }
  func.func @transform_2(%arg0: i32) -> (i32, i32) {
    %c0_i32 = arith.constant 0 : i32
    %c0_i32_0 = arith.constant 0 : i32
    %c0_i32_1 = arith.constant 0 : i32
    return %c0_i32, %c0_i32_0 : i32, i32
  }
  func.func @transform_3(%arg0: i32) -> (i32, i32, i32) {
    %c0_i32 = arith.constant 0 : i32
    %c0_i32_0 = arith.constant 0 : i32
    %c0_i32_1 = arith.constant 0 : i32
    return %arg0, %c0_i32, %c0_i32_0 : i32, i32, i32
  }
}

</mosaic_0001>

<llo_original>
// kernel: tpu_custom_call.1
$region0: #{tpu_custom_call.1}
  #allocation0 [shape = 'u32[]', space=smem, size = 0x4, offset = 0x4, fixed_abs, tag = 'smem constant byte address 0x4 - core index']
  #allocation1 [shape = 'u32[72,128]{1,0:T(1,128)}', space=vmem, size = 0x9000, scoped, tag = 'internal scratch']
  %s0 = inlined_call_operand.vmem [shape: f32[1,36,128], index: 0, kind: input, shape index: {}]
  %s1 = inlined_call_operand.vmem [shape: f32[8,36], index: 1, kind: input, shape index: {}]
  %s2 = inlined_call_operand.vmem [shape: f32[8,1], index: 2, kind: input, shape index: {}]
  %s3 = inlined_call_operand.hbm [shape: f32[1,8,128], index: 3, kind: output, shape index: {}]
  %s4 = sld [smem:[#allocation0]]
  $region22: #{tpu_custom_call.1} parent=0
    _
  %s6 = ssub.s32 1, %s4
  %s7 = scalar_select 0, %s6, %s4
  $region1: #{tpu_custom_call.1} parent=0
    #allocation2 [shape = 'u8[4096]{0}', space=vmem, size = 0x1000, scoped, tag = 'output window, operand 0, single buffered']
    #allocation3 [shape = 's32[1]{0}', space=sflag, size = 0x4, scoped, tag = 'scoped memory for tpu_custom_call.1']
    %8 = vsyncpa [#allocation3], 0
    // Predicated region
    $region2: #{tpu_custom_call.1} parent=1 // pred_check
      _
    $region3: #{tpu_custom_call.1} parent=1 // pred_check_branch
      %10 = sbr.rel (0) target = $region5
    $region4: #{tpu_custom_call.1} parent=1 // pred_region
      _
    $region5: #{tpu_custom_call.1} parent=1 // pred_fallthru
      _
    // Predicated region
    $region6: #{tpu_custom_call.1} parent=1 // pred_check
      _
    $region7: #{tpu_custom_call.1} parent=1 // pred_check_branch
      %12 = sbr.rel (0) target = $region9
    $region8: #{tpu_custom_call.1} parent=1 // pred_region
      _
    $region9: #{tpu_custom_call.1} parent=1 // pred_fallthru
      _
    // Predicated region
    $region10: #{tpu_custom_call.1} parent=1 // pred_check
      _
    $region11: #{tpu_custom_call.1} parent=1 // pred_check_branch
      %14 = sbr.rel (0) target = $region13
    $region12: #{tpu_custom_call.1} parent=1 // pred_region
      _
    $region13: #{tpu_custom_call.1} parent=1 // pred_fallthru
      _
    %v15 = vld [vmem:[%s0] sm:$0xf]
    %v16 = vld [vmem:[%s1] sm:$0xff]
    %v17 = vld [vmem:[%s0 + $0x4] sm:$0xf]
    %19 = vrot.lane.b32.xlu0 %v16, 124
    %v20 = vpop.permute.xlu0 %19
    %vm21 = vcmask 31744
    %v22 = vsel %vm21, %v20, 0
    %vm24 = vcmask 1043456
    %v26 = vsel %vm24, %v17, 0
    %28 = vmatpush.msra.mxu0 0.0
    %29 = vmatpush.msra.mxu0 0.0
    %30 = vmatpush.msra.mxu0 0.0
    %31 = vmatpush.msra.mxu0 0.0
    %32 = vmatpush.msra.mxu0 0.0
    %33 = vmatpush.msra.mxu0 0.0
    %34 = vmatpush.msra.mxu0 0.0
    %35 = vmatpush.msra.mxu0 0.0
    %36 = vmatpush.msra.mxu0 0.0
    %37 = vmatpush.msra.mxu0 0.0
    %38 = vmatpush.msra.mxu0 0.0
    %39 = vmatpush.msra.mxu0 0.0
    %40 = vmatpush.msra.mxu0 0.0
    %41 = vmatpush.msra.mxu0 0.0
    %42 = vmatpush.msra.mxu0 0.0
    %43 = vmatpush.msra.mxu0 %v26
    %44 = vmatmul.f32.gmra.mxu0 %v22
    %v45 = vpop.f32.mrf.mxu0
    %v46 = vadd.f32 0.0, %v45
    %47 = vdwg.mxu0
    %v48 = vsel %vm21, %v16, 0
    %v51 = vsel %vm24, %v15, 0
    %53 = vmatpush.msra.mxu0 0.0
    %54 = vmatpush.msra.mxu0 0.0
    %55 = vmatpush.msra.mxu0 0.0
    %56 = vmatpush.msra.mxu0 0.0
    %57 = vmatpush.msra.mxu0 0.0
    %58 = vmatpush.msra.mxu0 0.0
    %59 = vmatpush.msra.mxu0 0.0
    %60 = vmatpush.msra.mxu0 0.0
    %61 = vmatpush.msra.mxu0 0.0
    %62 = vmatpush.msra.mxu0 0.0
    %63 = vmatpush.msra.mxu0 0.0
    %64 = vmatpush.msra.mxu0 0.0
    %65 = vmatpush.msra.mxu0 0.0
    %66 = vmatpush.msra.mxu0 0.0
    %67 = vmatpush.msra.mxu0 0.0
    %68 = vmatpush.msra.mxu0 %v51
    %69 = vmatmul.f32.gmra.mxu0 %v48
    %v70 = vpop.f32.mrf.mxu0
    %v71 = vadd.f32 %v46, %v70
    %72 = vdwg.mxu0
    %v73 = vld [vmem:[%s0 + $0x8] sm:$0xf]
    %74 = vrot.lane.b32.xlu0 %v16, 120
    %v75 = vpop.permute.xlu0 %74
    %v76 = vsel %vm21, %v75, 0
    %v79 = vsel %vm24, %v73, 0
    %81 = vmatpush.msra.mxu0 0.0
    %82 = vmatpush.msra.mxu0 0.0
    %83 = vmatpush.msra.mxu0 0.0
    %84 = vmatpush.msra.mxu0 0.0
    %85 = vmatpush.msra.mxu0 0.0
    %86 = vmatpush.msra.mxu0 0.0
    %87 = vmatpush.msra.mxu0 0.0
    %88 = vmatpush.msra.mxu0 0.0
    %89 = vmatpush.msra.mxu0 0.0
    %90 = vmatpush.msra.mxu0 0.0
    %91 = vmatpush.msra.mxu0 0.0
    %92 = vmatpush.msra.mxu0 0.0
    %93 = vmatpush.msra.mxu0 0.0
    %94 = vmatpush.msra.mxu0 0.0
    %95 = vmatpush.msra.mxu0 0.0
    %96 = vmatpush.msra.mxu0 %v79
    %97 = vmatmul.f32.gmra.mxu0 %v76
    %v98 = vpop.f32.mrf.mxu0
    %v99 = vadd.f32 0.0, %v98
    %100 = vdwg.mxu0
    %v101 = vadd.f32 %v71, %v99
    %v102 = vld [vmem:[%s0 + $0xc] sm:$0xf]
    %103 = vrot.lane.b32.xlu0 %v16, 116
    %v104 = vpop.permute.xlu0 %103
    %v105 = vsel %vm21, %v104, 0
    %v108 = vsel %vm24, %v102, 0
    %110 = vmatpush.msra.mxu0 0.0
    %111 = vmatpush.msra.mxu0 0.0
    %112 = vmatpush.msra.mxu0 0.0
    %113 = vmatpush.msra.mxu0 0.0
    %114 = vmatpush.msra.mxu0 0.0
    %115 = vmatpush.msra.mxu0 0.0
    %116 = vmatpush.msra.mxu0 0.0
    %117 = vmatpush.msra.mxu0 0.0
    %118 = vmatpush.msra.mxu0 0.0
    %119 = vmatpush.msra.mxu0 0.0
    %120 = vmatpush.msra.mxu0 0.0
    %121 = vmatpush.msra.mxu0 0.0
    %122 = vmatpush.msra.mxu0 0.0
    %123 = vmatpush.msra.mxu0 0.0
    %124 = vmatpush.msra.mxu0 0.0
    %125 = vmatpush.msra.mxu0 %v108
    %126 = vmatmul.f32.gmra.mxu0 %v105
    %v127 = vpop.f32.mrf.mxu0
    %v128 = vadd.f32 0.0, %v127
    %129 = vdwg.mxu0
    %v130 = vadd.f32 %v101, %v128
    %v131 = vld [vmem:[%s0 + $0x10] sm:$0xf]
    %132 = vrot.lane.b32.xlu0 %v16, 112
    %v133 = vpop.permute.xlu0 %132
    %v134 = vsel %vm21, %v133, 0
    %v137 = vsel %vm24, %v131, 0
    %139 = vmatpush.msra.mxu0 0.0
    %140 = vmatpush.msra.mxu0 0.0
    %141 = vmatpush.msra.mxu0 0.0
    %142 = vmatpush.msra.mxu0 0.0
    %143 = vmatpush.msra.mxu0 0.0
    %144 = vmatpush.msra.mxu0 0.0
    %145 = vmatpush.msra.mxu0 0.0
    %146 = vmatpush.msra.mxu0 0.0
    %147 = vmatpush.msra.mxu0 0.0
    %148 = vmatpush.msra.mxu0 0.0
    %149 = vmatpush.msra.mxu0 0.0
    %150 = vmatpush.msra.mxu0 0.0
    %151 = vmatpush.msra.mxu0 0.0
    %152 = vmatpush.msra.mxu0 0.0
    %153 = vmatpush.msra.mxu0 0.0
    %154 = vmatpush.msra.mxu0 %v137
    %155 = vmatmul.f32.gmra.mxu0 %v134
    %v156 = vpop.f32.mrf.mxu0
    %v157 = vadd.f32 0.0, %v156
    %158 = vdwg.mxu0
    %v159 = vadd.f32 %v130, %v157
    %v160 = vld [vmem:[%s0 + $0x14] sm:$0xf]
    %161 = vrot.lane.b32.xlu0 %v16, 108
    %v162 = vpop.permute.xlu0 %161
    %v163 = vsel %vm21, %v162, 0
    %v166 = vsel %vm24, %v160, 0
    %168 = vmatpush.msra.mxu0 0.0
    %169 = vmatpush.msra.mxu0 0.0
    %170 = vmatpush.msra.mxu0 0.0
    %171 = vmatpush.msra.mxu0 0.0
    %172 = vmatpush.msra.mxu0 0.0
    %173 = vmatpush.msra.mxu0 0.0
    %174 = vmatpush.msra.mxu0 0.0
    %175 = vmatpush.msra.mxu0 0.0
    %176 = vmatpush.msra.mxu0 0.0
    %177 = vmatpush.msra.mxu0 0.0
    %178 = vmatpush.msra.mxu0 0.0
    %179 = vmatpush.msra.mxu0 0.0
    %180 = vmatpush.msra.mxu0 0.0
    %181 = vmatpush.msra.mxu0 0.0
    %182 = vmatpush.msra.mxu0 0.0
    %183 = vmatpush.msra.mxu0 %v166
    %184 = vmatmul.f32.gmra.mxu0 %v163
    %v185 = vpop.f32.mrf.mxu0
    %v186 = vadd.f32 0.0, %v185
    %187 = vdwg.mxu0
    %v188 = vadd.f32 %v159, %v186
    %v189 = vld [vmem:[%s0 + $0x18] sm:$0xf]
    %190 = vrot.lane.b32.xlu0 %v16, 104
    %v191 = vpop.permute.xlu0 %190
    %v192 = vsel %vm21, %v191, 0
    %v195 = vsel %vm24, %v189, 0
    %197 = vmatpush.msra.mxu0 0.0
    %198 = vmatpush.msra.mxu0 0.0
    %199 = vmatpush.msra.mxu0 0.0
    %200 = vmatpush.msra.mxu0 0.0
    %201 = vmatpush.msra.mxu0 0.0
    %202 = vmatpush.msra.mxu0 0.0
    %203 = vmatpush.msra.mxu0 0.0
    %204 = vmatpush.msra.mxu0 0.0
    %205 = vmatpush.msra.mxu0 0.0
    %206 = vmatpush.msra.mxu0 0.0
    %207 = vmatpush.msra.mxu0 0.0
    %208 = vmatpush.msra.mxu0 0.0
    %209 = vmatpush.msra.mxu0 0.0
    %210 = vmatpush.msra.mxu0 0.0
    %211 = vmatpush.msra.mxu0 0.0
    %212 = vmatpush.msra.mxu0 %v195
    %213 = vmatmul.f32.gmra.mxu0 %v192
    %v214 = vpop.f32.mrf.mxu0
    %v215 = vadd.f32 0.0, %v214
    %216 = vdwg.mxu0
    %v217 = vadd.f32 %v188, %v215
    %v218 = vld [vmem:[%s0 + $0x1c] sm:$0xf]
    %219 = vrot.lane.b32.xlu0 %v16, 100
    %v220 = vpop.permute.xlu0 %219
    %v221 = vsel %vm21, %v220, 0
    %v224 = vsel %vm24, %v218, 0
    %226 = vmatpush.msra.mxu0 0.0
    %227 = vmatpush.msra.mxu0 0.0
    %228 = vmatpush.msra.mxu0 0.0
    %229 = vmatpush.msra.mxu0 0.0
    %230 = vmatpush.msra.mxu0 0.0
    %231 = vmatpush.msra.mxu0 0.0
    %232 = vmatpush.msra.mxu0 0.0
    %233 = vmatpush.msra.mxu0 0.0
    %234 = vmatpush.msra.mxu0 0.0
    %235 = vmatpush.msra.mxu0 0.0
    %236 = vmatpush.msra.mxu0 0.0
    %237 = vmatpush.msra.mxu0 0.0
    %238 = vmatpush.msra.mxu0 0.0
    %239 = vmatpush.msra.mxu0 0.0
    %240 = vmatpush.msra.mxu0 0.0
    %241 = vmatpush.msra.mxu0 %v224
    %242 = vmatmul.f32.gmra.mxu0 %v221
    %v243 = vpop.f32.mrf.mxu0
    %v244 = vadd.f32 0.0, %v243
    %245 = vdwg.mxu0
    %v246 = vadd.f32 %v217, %v244
    %v247 = vld [vmem:[%s0 + $0x20] sm:$0xf]
    %248 = vrot.lane.b32.xlu0 %v16, 96
    %v249 = vpop.permute.xlu0 %248
    %v250 = vsel %vm21, %v249, 0
    %v253 = vsel %vm24, %v247, 0
    %255 = vmatpush.msra.mxu0 0.0
    %256 = vmatpush.msra.mxu0 0.0
    %257 = vmatpush.msra.mxu0 0.0
    %258 = vmatpush.msra.mxu0 0.0
    %259 = vmatpush.msra.mxu0 0.0
    %260 = vmatpush.msra.mxu0 0.0
    %261 = vmatpush.msra.mxu0 0.0
    %262 = vmatpush.msra.mxu0 0.0
    %263 = vmatpush.msra.mxu0 0.0
    %264 = vmatpush.msra.mxu0 0.0
    %265 = vmatpush.msra.mxu0 0.0
    %266 = vmatpush.msra.mxu0 0.0
    %267 = vmatpush.msra.mxu0 0.0
    %268 = vmatpush.msra.mxu0 0.0
    %269 = vmatpush.msra.mxu0 0.0
    %270 = vmatpush.msra.mxu0 %v253
    %271 = vmatmul.f32.gmra.mxu0 %v250
    %v272 = vpop.f32.mrf.mxu0
    %v273 = vadd.f32 0.0, %v272
    %274 = vdwg.mxu0
    %v275 = vadd.f32 %v246, %v273
    %v276 = vld [vmem:[%s2] sm:$0xff]
    %278 = vset.pattern.permute.xlu0 0
    %279 = vperm.xlu0 %278, %v276
    %v280 = vpop.permute.xlu0 %279
    %v282 = vadd.f32 %v275, %v280
    %vm283 = vcmp.gt.f32.partialorder %v282, 0.0
    %v284 = vmul.f32 %v282, 0.01
    %v285 = vsel %vm283, %v282, %v284
    %vm286 = vcmask 523264
    %v287 = vsel %vm286, %v285, 0.0
    %288 = vadd.xlane.f32.xlu0 %v287
    %v289 = vpop.xlane.xlu0 %288
    %v290 = vrcp.pop 64.0
    %v291 = vmul.f32 64.0, %v290
    %v292 = vsub.f32 1.0, %v291
    %v293 = vmul.f32 %v290, %v292
    %v294 = vadd.f32 %v290, %v293
    %vm295 = vweird.f32 %v290
    %v296 = vsel %vm295, %v290, %v294
    %v297 = vmul.f32 %v289, %v296
    %v298 = vsub.f32 %v285, %v297
    %v299 = vmul.f32 %v298, %v298
    %v300 = vsel %vm286, %v299, 0.0
    %301 = vadd.xlane.f32.xlu0 %v300
    %v302 = vpop.xlane.xlu0 %301
    %v303 = vmul.f32 %v302, %v296
    %v304 = vadd.f32 %v303, 1e-05
    %v305 = vrsqrt.pop %v304
    %v306 = vmul.f32 %v305, %v304
    %v307 = vmul.f32 %v306, %v305
    %v308 = vmul.f32 0.5, %v307
    %v309 = vsub.f32 1.5, %v308
    %v310 = vmul.f32 %v305, %v309
    %vm311 = vweird.f32 %v304
    %vm312 = vweird.f32 %v305
    %vm313 = vmor %vm311, %vm312
    %v314 = vsel %vm313, %v305, %v310
    %v315 = vmul.f32 %v298, %v314
    %317 = vrot.lane.b32.xlu0 %v285, 64
    %v318 = vpop.permute.xlu0 %317
    %v320 = vsel %vm286, %v318, 0.0
    %321 = vadd.xlane.f32.xlu0 %v320
    %v322 = vpop.xlane.xlu0 %321
    %v323 = vmul.f32 %v322, %v296
    %v324 = vsub.f32 %v285, %v323
    %v325 = vmul.f32 %v324, %v324
    %327 = vrot.lane.b32.xlu0 %v325, 64
    %v328 = vpop.permute.xlu0 %327
    %v330 = vsel %vm286, %v328, 0.0
    %331 = vadd.xlane.f32.xlu0 %v330
    %v332 = vpop.xlane.xlu0 %331
    %v333 = vmul.f32 %v332, %v296
    %v334 = vadd.f32 %v333, 1e-05
    %v335 = vrsqrt.pop %v334
    %v336 = vmul.f32 %v335, %v334
    %v337 = vmul.f32 %v336, %v335
    %v338 = vmul.f32 0.5, %v337
    %v339 = vsub.f32 1.5, %v338
    %v340 = vmul.f32 %v335, %v339
    %vm341 = vweird.f32 %v334
    %vm342 = vweird.f32 %v335
    %vm343 = vmor %vm341, %vm342
    %v344 = vsel %vm343, %v335, %v340
    %v345 = vmul.f32 %v324, %v344
    %v346 = vsel %vm286, %v315, %v345
    %347 = vst [vmem:[#allocation2] sm:$0xff] %v346
    // Predicated region
    $region14: #{tpu_custom_call.1} parent=1 // pred_check
      _
    $region15: #{tpu_custom_call.1} parent=1 // pred_check_branch
      %349 = sbr.rel (0) target = $region17
    $region16: #{tpu_custom_call.1} parent=1 // pred_region
      %351 = vsyncadd [#allocation3], 0
      %s353 = sshll.u32 [#allocation2], 4
      %s354 = int_to_ptr.vmem [resolvable:$true] %s353
      %s355 = sshll.u32 %s3, 4
      %s356 = int_to_ptr.hbm [resolvable:$true] %s355
      %358 = dma.vmem_to_hbm [thread:$0]  %s354, 128, %s356, [#allocation3]
    $region17: #{tpu_custom_call.1} parent=1 // pred_fallthru
      _
    // Predicated region
    $region18: #{tpu_custom_call.1} parent=1 // pred_check
      _
    $region19: #{tpu_custom_call.1} parent=1 // pred_check_branch
      %360 = sbr.rel (0) target = $region21
    $region20: #{tpu_custom_call.1} parent=1 // pred_region
      %362 = dma.done [#allocation3], 128
    $region21: #{tpu_custom_call.1} parent=1 // pred_fallthru
      _
    %363 = vsyncpa [#allocation3], 1

</llo_original>
